<compile_context>
chip_gen: v6e
topology: v6e:2x2x1
jax: 0.10.0
libtpu: 0.0.40
codegen_flags: <defaults>
</compile_context>

<pallas_src>
import functools

import jax
import jax.numpy as jnp
from jax.experimental import pallas as pl
from jax.experimental.pallas import tpu as pltpu

LANE = 128


def _round_up(x, m):
    return ((x + m - 1) // m) * m


def _largest_divisor(m, cap):
    d = min(m, cap)
    while m % d:
        d -= 1
    return d


def gcn_layer_kernel(a_ref, z_ref, w_ref, b_ref, o_ref, acc_ref, *, tk, apply_relu):
    """One GCNConv layer tile:  out = act( (A_hat @ Z) @ W + b ).

    a_ref  : (tm, tk)        bf16  tile of the normalized adjacency
    z_ref  : (n_pad, F_in)   bf16  full lane-padded input features (VMEM-resident)
    w_ref  : (F_in, F_out)   bf16  padded layer weight (VMEM-resident)
    b_ref  : (1,  F_out)     f32   padded bias (VMEM-resident)
    o_ref  : (tm, F_out)           output tile (written only on the last K step)
    acc_ref: (tm, F_in)      f32   A_hat @ Z accumulator scratch
    """
    k = pl.program_id(1)

    # Slice the K-stripe of the resident Z; start is a static multiple of tk.
    k0 = pl.multiple_of(k * tk, tk)
    z_blk = z_ref[pl.ds(k0, tk), :]

    prod = jnp.dot(a_ref[...], z_blk, preferred_element_type=jnp.float32)

    @pl.when(k == 0)
    def _():
        acc_ref[...] = prod

    @pl.when(k > 0)
    def _():
        acc_ref[...] += prod

    @pl.when(k == pl.num_programs(1) - 1)
    def _():
        out = (
            jnp.dot(
                acc_ref[...].astype(jnp.bfloat16),
                w_ref[...],
                preferred_element_type=jnp.float32,
            )
            + b_ref[...]
        )
        if apply_relu:
            out = jnp.maximum(out, 0.0)
        o_ref[...] = out.astype(o_ref.dtype)


def gcn_layer(a_hat, z, w, b, *, apply_relu, out_dtype, tm, tk):
    """Tiled pallas_call for one GCN layer on padded operands."""
    n_pad = a_hat.shape[0]
    f_in = z.shape[1]
    f_out = w.shape[1]
    grid = (n_pad // tm, n_pad // tk)

    out_isize = jnp.dtype(out_dtype).itemsize
    flops = 2 * n_pad * n_pad * f_in + 2 * n_pad * f_in * f_out
    bytes_accessed = (
        a_hat.size * a_hat.dtype.itemsize      # A streamed once
        + z.size * z.dtype.itemsize            # Z resident -> read once
        + w.size * w.dtype.itemsize
        + b.size * 4
        + n_pad * f_out * out_isize
    )

    # VMEM footprint (double-buffered pipeline buffers + accumulator scratch).
    footprint = (
        2 * tm * tk * 2            # A tiles (bf16)
        + 2 * n_pad * f_in * 2     # resident Z (bf16)
        + 2 * f_in * f_out * 2     # resident W (bf16)
        + 2 * 8 * f_out * 4        # bias (padded to 8 sublanes)
        + 2 * tm * f_out * out_isize
        + tm * f_in * 4            # accumulator scratch
    )
    vmem_limit = min(100 * 1024 * 1024, max(32 * 1024 * 1024, int(footprint * 1.25)))

    kernel = functools.partial(gcn_layer_kernel, tk=tk, apply_relu=apply_relu)
    return pl.pallas_call(
        kernel,
        out_shape=jax.ShapeDtypeStruct((n_pad, f_out), out_dtype),
        grid_spec=pltpu.PrefetchScalarGridSpec(
            num_scalar_prefetch=0,
            grid=grid,
            in_specs=[
                pl.BlockSpec((tm, tk), lambda i, k: (i, k)),         # A_hat tile
                pl.BlockSpec((n_pad, f_in), lambda i, k: (0, 0)),    # Z (resident)
                pl.BlockSpec((f_in, f_out), lambda i, k: (0, 0)),    # W (resident)
                pl.BlockSpec((1, f_out), lambda i, k: (0, 0)),       # bias (resident)
            ],
            out_specs=pl.BlockSpec((tm, f_out), lambda i, k: (i, 0)),
            scratch_shapes=[pltpu.VMEM((tm, f_in), jnp.float32)],
        ),
        compiler_params=pltpu.CompilerParams(
            dimension_semantics=("parallel", "arbitrary"),
            vmem_limit_bytes=vmem_limit,
        ),
        cost_estimate=pl.CostEstimate(
            flops=flops, transcendentals=0, bytes_accessed=bytes_accessed
        ),
    )(a_hat, z, w, b)


def build_normalized_adjacency(edge_index, num_nodes, padded_nodes):
    """Dense A_hat = D^{-1/2} (A + I) D^{-1/2}, matching PyG GCNConv defaults,
    built directly at the padded size (padded rows/cols are exactly zero).
    Normalization is done in f32; cast to bf16 happens in the caller."""
    src = edge_index[0]
    dst = edge_index[1]
    loop = jnp.arange(num_nodes, dtype=edge_index.dtype)
    src = jnp.concatenate([src, loop])
    dst = jnp.concatenate([dst, loop])
    a = jnp.zeros((padded_nodes, padded_nodes), dtype=jnp.float32)
    a = a.at[dst, src].add(1.0)
    deg = jnp.sum(a, axis=1)
    deg_inv_sqrt = jnp.where(deg > 0, jax.lax.rsqrt(deg), 0.0)
    return deg_inv_sqrt[:, None] * a * deg_inv_sqrt[None, :]


def _pad_to(x, rows, cols):
    r, c = x.shape
    return jnp.pad(x, ((0, rows - r), (0, cols - c)))


def _choose_tiling(n):
    """Pick (n_pad, tm, tk): n_pad is a tight multiple of 128, tm and tk are
    128-multiples dividing n_pad, tm <= 1024, tk <= 2048, and the row-tile
    grid axis has >= 2 blocks (so v7x's second TensorCore gets work)."""
    n_pad = _round_up(n, LANE)
    m = n_pad // LANE
    tk = LANE * _largest_divisor(m, 16)   # reduction stripe, <= 2048
    tm = LANE * _largest_divisor(m, 8)    # row tile, <= 1024

    if n_pad // tm < 2:  # only one row tile -> split it
        if m % 2 == 0:
            tm = n_pad // 2                       # still a 128 multiple
        elif m > 1:
            tm = LANE * _largest_divisor(m, m // 2)
        else:
            tm = n_pad // 2                       # 64 rows; multiple of the 8-sublane tile
    return n_pad, tm, tk


def gcn_forward(x, edge_index, params):
    """Builds A_hat in plain JAX, runs one tiled Pallas kernel per GCN layer."""
    w1, b1, w2, b2 = params
    n, c_in = x.shape
    c_h = w1.shape[1]
    c_out = w2.shape[1]

    f_in = _round_up(c_in, LANE)
    f_h = _round_up(c_h, LANE)
    f_out = _round_up(c_out, LANE)
    n_pad, tm, tk = _choose_tiling(n)

    # bf16 for the quadratic-size adjacency and the activations (halved HBM/VMEM
    # traffic, 2x MXU rate); accumulation stays f32 inside the kernel.
    a_hat = build_normalized_adjacency(edge_index, n, n_pad).astype(jnp.bfloat16)
    x_p = _pad_to(x, n_pad, f_in).astype(jnp.bfloat16)
    w1_p = _pad_to(w1, f_in, f_h).astype(jnp.bfloat16)
    b1_p = _pad_to(b1, 1, f_h).astype(jnp.float32)
    w2_p = _pad_to(w2, f_h, f_out).astype(jnp.bfloat16)
    b2_p = _pad_to(b2, 1, f_out).astype(jnp.float32)

    # layer 1: relu( (A @ X) @ W1 + b1 )   -> bf16 activations for layer 2
    # (padded rows of h equal relu(b1); harmless since their A columns are zero
    #  and the final slice drops them — do not reuse padded h elsewhere.)
    h = gcn_layer(
        a_hat, x_p, w1_p, b1_p, apply_relu=True, out_dtype=jnp.bfloat16, tm=tm, tk=tk
    )
    # layer 2: (A @ H) @ W2 + b2           -> f32 final logits
    out = gcn_layer(
        a_hat, h, w2_p, b2_p, apply_relu=False, out_dtype=jnp.float32, tm=tm, tk=tk
    )
    return out[:n, :c_out]


def init_params(key, in_channels, hidden_channels, out_channels):
    """Deterministic glorot-style init matching GCNConv parameter shapes."""
    k1, k2 = jax.random.split(key)

    def glorot(k, fan_in, fan_out):
        limit = jnp.sqrt(6.0 / (fan_in + fan_out))
        return jax.random.uniform(
            k, (fan_in, fan_out), dtype=jnp.float32, minval=-limit, maxval=limit
        )

    w1 = glorot(k1, in_channels, hidden_channels)
    b1 = jnp.zeros((1, hidden_channels), dtype=jnp.float32)
    w2 = glorot(k2, hidden_channels, out_channels)
    b2 = jnp.zeros((1, out_channels), dtype=jnp.float32)
    return w1, b1, w2, b2


def gcn_reference(x, edge_index, params):
    """Pure-JAX f32 reference of the same forward pass (for a sanity check)."""
    w1, b1, w2, b2 = params
    n = x.shape[0]
    a_hat = build_normalized_adjacency(edge_index, n, n)
    h = a_hat @ (x @ w1) + b1
    h = jnp.maximum(h, 0.0)
    return a_hat @ (h @ w2) + b2


if __name__ == "__main__":
    key = jax.random.PRNGKey(0)
    k_x, k_e, k_p = jax.random.split(key, 3)

    num_nodes = 16
    in_channels = 8
    hidden_channels = 16
    out_channels = 4
    num_edges = 40

    # deterministic node features and a deterministic random directed edge list
    x = jax.random.normal(k_x, (num_nodes, in_channels), dtype=jnp.float32)
    edge_index = jax.random.randint(
        k_e, (2, num_edges), minval=0, maxval=num_nodes, dtype=jnp.int32
    )

    params = init_params(k_p, in_channels, hidden_channels, out_channels)

    out = gcn_forward(x, edge_index, params)
    out = jax.block_until_ready(out)

    ref = gcn_reference(x, edge_index, params)
    assert out.shape == (num_nodes, out_channels)
    # bf16 adjacency/activations/weights inside the kernel -> loosened tolerance
    assert jnp.allclose(out, ref, atol=5e-2, rtol=5e-2), (
        float(jnp.max(jnp.abs(out - ref)))
    )

    print("KERNEL_OK")
</pallas_src>

<mosaic_0001>
module attributes {stable_mosaic.version = 11 : i64} {
  func.func @gcn_layer_kernel(%arg0: i32, %arg1: i32, %arg2: memref<64x128xbf16, #tpu.memory_space<vmem>>, %arg3: memref<128x128xbf16, #tpu.memory_space<vmem>>, %arg4: memref<128x128xbf16, #tpu.memory_space<vmem>>, %arg5: memref<1x128xf32, #tpu.memory_space<vmem>>, %arg6: memref<64x128xbf16, #tpu.memory_space<vmem>>, %arg7: memref<64x128xf32, #tpu.memory_space<vmem>>) attributes {dimension_semantics = [#tpu.dimension_semantics<parallel>, #tpu.dimension_semantics<arbitrary>], iteration_bounds = array<i64: 2, 1>, scalar_prefetch = 0 : i64, scratch_operands = 1 : i64, tpu.core_type = #tpu.core_type<tc>, window_params = [{transform_indices = @transform_0, window_bounds = array<i64: 64, 128>}, {pipeline_mode = #tpu.pipeline_mode<synchronous>, transform_indices = @transform_1, window_bounds = array<i64: 128, 128>}, {pipeline_mode = #tpu.pipeline_mode<synchronous>, transform_indices = @transform_2, window_bounds = array<i64: 128, 128>}, {pipeline_mode = #tpu.pipeline_mode<synchronous>, transform_indices = @transform_3, window_bounds = array<i64: 1, 128>}, {transform_indices = @transform_4, window_bounds = array<i64: 64, 128>}]} {
    %c128_i32 = arith.constant 128 : i32
    %0 = arith.muli %arg1, %c128_i32 : i32
    %1 = tpu.assume_multiple %0, 128 : i32
    %2 = arith.index_cast %1 : i32 to index
    %c0 = arith.constant 0 : index
    %3 = vector.load %arg3[%2, %c0] : memref<128x128xbf16, #tpu.memory_space<vmem>>, vector<128x128xbf16>
    %c0_0 = arith.constant 0 : index
    %c0_1 = arith.constant 0 : index
    %4 = vector.load %arg2[%c0_0, %c0_1] : memref<64x128xbf16, #tpu.memory_space<vmem>>, vector<64x128xbf16>
    %cst = arith.constant dense<0.000000e+00> : vector<64x128xf32>
    %5 = tpu.matmul %4, %3, %cst {dimension_numbers = #tpu.dot_dimension_numbers<[1], [0], [0], [1], [0, 0, 1, 1], [], []>} : vector<64x128xbf16>, vector<128x128xbf16>, vector<64x128xf32> -> vector<64x128xf32>
    %c0_i32 = arith.constant 0 : i32
    %6 = arith.cmpi eq, %arg1, %c0_i32 : i32
    %7 = arith.extui %6 : i1 to i32
    %c0_i32_2 = arith.constant 0 : i32
    %8 = arith.cmpi ne, %7, %c0_i32_2 : i32
    scf.if %8 {
      %c0_7 = arith.constant 0 : index
      %c0_8 = arith.constant 0 : index
      %15 = vector.load %arg7[%c0_7, %c0_8] : memref<64x128xf32, #tpu.memory_space<vmem>>, vector<64x128xf32>
      tpu.vector_store %arg7[%c0_7, %c0_8], %5 {strides = array<i32>} : memref<64x128xf32, #tpu.memory_space<vmem>>, vector<64x128xf32>,
    } else {
    }
    %c0_i32_3 = arith.constant 0 : i32
    %9 = arith.cmpi sgt, %arg1, %c0_i32_3 : i32
    %10 = arith.extui %9 : i1 to i32
    %c0_i32_4 = arith.constant 0 : i32
    %11 = arith.cmpi ne, %10, %c0_i32_4 : i32
    scf.if %11 {
      %c0_7 = arith.constant 0 : index
      %c0_8 = arith.constant 0 : index
      %15 = vector.load %arg7[%c0_7, %c0_8] : memref<64x128xf32, #tpu.memory_space<vmem>>, vector<64x128xf32>
      %16 = arith.addf %15, %5 : vector<64x128xf32>
      %c0_9 = arith.constant 0 : index
      %c0_10 = arith.constant 0 : index
      %17 = vector.load %arg7[%c0_9, %c0_10] : memref<64x128xf32, #tpu.memory_space<vmem>>, vector<64x128xf32>
      tpu.vector_store %arg7[%c0_9, %c0_10], %16 {strides = array<i32>} : memref<64x128xf32, #tpu.memory_space<vmem>>, vector<64x128xf32>,
    } else {
    }
    %c0_i32_5 = arith.constant 0 : i32
    %12 = arith.cmpi eq, %arg1, %c0_i32_5 : i32
    %13 = arith.extui %12 : i1 to i32
    %c0_i32_6 = arith.constant 0 : i32
    %14 = arith.cmpi ne, %13, %c0_i32_6 : i32
    scf.if %14 {
      %c0_7 = arith.constant 0 : index
      %c0_8 = arith.constant 0 : index
      %15 = vector.load %arg7[%c0_7, %c0_8] : memref<64x128xf32, #tpu.memory_space<vmem>>, vector<64x128xf32>
      %16 = arith.truncf %15 : vector<64x128xf32> to vector<64x128xbf16>
      %c0_9 = arith.constant 0 : index
      %c0_10 = arith.constant 0 : index
      %17 = vector.load %arg4[%c0_9, %c0_10] : memref<128x128xbf16, #tpu.memory_space<vmem>>, vector<128x128xbf16>
      %cst_11 = arith.constant dense<0.000000e+00> : vector<64x128xf32>
      %18 = tpu.matmul %16, %17, %cst_11 {dimension_numbers = #tpu.dot_dimension_numbers<[1], [0], [0], [1], [0, 0, 1, 1], [], []>} : vector<64x128xbf16>, vector<128x128xbf16>, vector<64x128xf32> -> vector<64x128xf32>
      %c0_12 = arith.constant 0 : index
      %c0_13 = arith.constant 0 : index
      %19 = vector.load %arg5[%c0_12, %c0_13] : memref<1x128xf32, #tpu.memory_space<vmem>>, vector<1x128xf32>
      %20 = vector.broadcast %19 : vector<1x128xf32> to vector<64x128xf32>
      %21 = arith.addf %18, %20 : vector<64x128xf32>
      %cst_14 = arith.constant 0.000000e+00 : f32
      %22 = vector.broadcast %cst_14 : f32 to vector<64x128xf32>
      %23 = arith.maximumf %21, %22 : vector<64x128xf32>
      %24 = arith.truncf %23 : vector<64x128xf32> to vector<64x128xbf16>
      %c0_15 = arith.constant 0 : index
      %c0_16 = arith.constant 0 : index
      %25 = vector.load %arg6[%c0_15, %c0_16] : memref<64x128xbf16, #tpu.memory_space<vmem>>, vector<64x128xbf16>
      tpu.vector_store %arg6[%c0_15, %c0_16], %24 {strides = array<i32>} : memref<64x128xbf16, #tpu.memory_space<vmem>>, vector<64x128xbf16>,
    } else {
    }
    return
  }
  func.func @transform_0(%arg0: i32, %arg1: i32) -> (i32, i32) {
    %c0_i32 = arith.constant 0 : i32
    return %arg0, %arg1 : i32, i32
  }
  func.func @transform_1(%arg0: i32, %arg1: i32) -> (i32, i32) {
    %c0_i32 = arith.constant 0 : i32
    %c0_i32_0 = arith.constant 0 : i32
    %c0_i32_1 = arith.constant 0 : i32
    return %c0_i32, %c0_i32_0 : i32, i32
  }
  func.func @transform_2(%arg0: i32, %arg1: i32) -> (i32, i32) {
    %c0_i32 = arith.constant 0 : i32
    %c0_i32_0 = arith.constant 0 : i32
    %c0_i32_1 = arith.constant 0 : i32
    return %c0_i32, %c0_i32_0 : i32, i32
  }
  func.func @transform_3(%arg0: i32, %arg1: i32) -> (i32, i32) {
    %c0_i32 = arith.constant 0 : i32
    %c0_i32_0 = arith.constant 0 : i32
    %c0_i32_1 = arith.constant 0 : i32
    return %c0_i32, %c0_i32_0 : i32, i32
  }
  func.func @transform_4(%arg0: i32, %arg1: i32) -> (i32, i32) {
    %c0_i32 = arith.constant 0 : i32
    %c0_i32_0 = arith.constant 0 : i32
    return %arg0, %c0_i32 : i32, i32
  }
}

</mosaic_0001>

<llo_original>
// kernel: tpu_custom_call.1
$region0: #{tpu_custom_call.1}
  #allocation0 [shape = 'u32[]', space=smem, size = 0x4, offset = 0x4, fixed_abs, tag = 'smem constant byte address 0x4 - core index']
  #allocation1 [shape = 'u32[144,128]{1,0:T(1,128)}', space=vmem, size = 0x12000, scoped, tag = 'internal scratch']
  #allocation2 [shape = 'f32[64,128]{1,0:T(8,128)}', space=vmem, size = 0x8000, scoped, tag = 'scratch operand']
  %s0 = inlined_call_operand.hbm [shape: bf16[128,128], index: 0, kind: input, shape index: {}]
  %s1 = inlined_call_operand.hbm [shape: bf16[128,128], index: 1, kind: input, shape index: {}]
  %s2 = inlined_call_operand.hbm [shape: bf16[128,128], index: 2, kind: input, shape index: {}]
  %s3 = inlined_call_operand.vmem [shape: f32[1,128], index: 3, kind: input, shape index: {}]
  %s4 = inlined_call_operand.hbm [shape: bf16[128,128], index: 4, kind: output, shape index: {}]
  %s5 = sld [smem:[#allocation0]]
  $region73: #{tpu_custom_call.1} parent=0
    _
  %s7 = ssub.s32 1, %s5
  %s8 = scalar_select 0, %s7, %s5
  $region1: #{tpu_custom_call.1} parent=0
    #allocation3 [shape = 'u8[32768]{0}', space=vmem, size = 0x8000, scoped, tag = 'input window, operand 0']
    #allocation4 [shape = 's32[2]{0}', space=sflag, size = 0x8, scoped, tag = 'scoped memory for tpu_custom_call.1']
    #allocation5 [shape = 's32[2]{0}', space=sflag, size = 0x8, scoped, tag = 'scoped memory for tpu_custom_call.1']
    #allocation6 [shape = 'u8[32768]{0}', space=vmem, size = 0x8000, scoped, tag = 'input window, operand 1, single buffered']
    #allocation7 [shape = 's32[1]{0}', space=sflag, size = 0x4, scoped, tag = 'scoped memory for tpu_custom_call.1']
    #allocation8 [shape = 'u8[32768]{0}', space=vmem, size = 0x8000, scoped, tag = 'input window, operand 2, single buffered']
    #allocation9 [shape = 'u8[32768]{0}', space=vmem, size = 0x8000, scoped, tag = 'output window, operand 0']
    %9 = vsyncpa [#allocation4], 0
    %s10 = scalar_lea.sflag [#allocation4], 1
    %11 = vsyncpa %s10, 0
    %12 = vsyncpa [#allocation7], 0
    %13 = vsyncpa [#allocation5], 0
    %s14 = scalar_lea.sflag [#allocation5], 1
    %15 = vsyncpa %s14, 0
    loop: start=0, step=1, limit=4
    $region2: #{tpu_custom_call.1} parent=1 // loop_pre_header
      _
    $region3: #{tpu_custom_call.1} parent=1 // loop_header
      %s17 = sphi 0, %s21
      %p18 = scmp.ge.s32.totalorder %s17, 4
      %s24 = sphi 0, %s36
      %s25 = sphi 0, %s32
      %s26 = sphi 0, %s24
      %s27 = sphi 0, %s25
      %s28 = sphi 0, %s26
      %s29 = sphi 0, %s27
      %s41 = sphi 0, %s43
      %s44 = sphi 0, %s41
      %s45 = sphi 0, %s44
      %s61 = sphi 0, %s45
      %s65 = sphi 0, %s65
      %s67 = sphi 0, %s65
      %s68 = sphi 0, %s67
      %s82 = sphi 0, %s68
      %s86 = sphi 0, %s86
      %s88 = sphi 0, %s86
      %s89 = sphi 0, %s88
      %s103 = sphi 0, %s89
      %s107 = sphi 0, %s107
      %s109 = sphi 0, %s107
      %s110 = sphi 0, %s109
      %s124 = sphi 0, %s110
      %s130 = sphi 0, %s132
      %s133 = sphi 0, %s130
      %s134 = sphi 0, %s133
      %s150 = sphi 0, %s134
    $region4: #{tpu_custom_call.1} parent=1 // loop_header_branch
      %20 = sbr.rel (%p18) target = $region8
    $region5: #{tpu_custom_call.1} parent=1 // loop_body
      %s22 = ssub.s32 %s17, 1
      %s23 = ssub.s32 %s17, 2
      %s30 = sadd.s32 1, %s25
      %p31 = scmp.ge.s32.totalorder %s30, 1
      %s32 = scalar_select %p31, 0, %s30
      %s33 = sadd.s32 1, %s24
      %s34 = scalar_select %p31, %s33, %s24
      %p35 = scmp.ge.s32.totalorder %s34, 2
      %s36 = scalar_select %p35, 0, %s34
      %s37 = ssub.s32 %s24, %s36
      %s38 = ssub.s32 %s25, %s32
      %s39 = sor.u32 %s37, %s38
      %p40 = scmp.eq.s32.totalorder %s39, 0
      %s42 = sadd.s32 %s41, 1
      %s43 = scalar_select %p40, %s41, %s42
      %p46 = pneg %p40
      %p47 = scmp.eq.s32.totalorder %s17, 1
      %p48 = por %p46, %p47
      %p49 = scmp.ne.s32.totalorder %s41, %s44
      %p50 = scmp.eq.s32.totalorder %s17, 0
      %p51 = por %p49, %p50
      %p52 = scmp.ne.s32.totalorder %s41, %s44
      %p53 = scmp.eq.s32.totalorder %s22, 1
      %p54 = por %p52, %p53
      %p55 = scmp.ne.s32.totalorder %s44, %s45
      %p56 = scmp.eq.s32.totalorder %s22, 0
      %p57 = por %p55, %p56
      %p58 = scmp.ne.s32.totalorder %s44, %s45
      %p59 = scmp.eq.s32.totalorder %s23, 1
      %p60 = por %p58, %p59
      %p62 = scmp.ne.s32.totalorder %s45, %s61
      %p63 = scmp.eq.s32.totalorder %s23, 0
      %p64 = por %p62, %p63
      %s66 = sadd.s32 %s65, 1
      %p69 = scmp.eq.s32.totalorder %s17, 1
      %p70 = scmp.ne.s32.totalorder %s65, %s67
      %p71 = scmp.eq.s32.totalorder %s17, 0
      %p72 = por %p70, %p71
      %p73 = scmp.ne.s32.totalorder %s65, %s67
      %p74 = scmp.eq.s32.totalorder %s22, 1
      %p75 = por %p73, %p74
      %p76 = scmp.ne.s32.totalorder %s67, %s68
      %p77 = scmp.eq.s32.totalorder %s22, 0
      %p78 = por %p76, %p77
      %p79 = scmp.ne.s32.totalorder %s67, %s68
      %p80 = scmp.eq.s32.totalorder %s23, 1
      %p81 = por %p79, %p80
      %p83 = scmp.ne.s32.totalorder %s68, %s82
      %p84 = scmp.eq.s32.totalorder %s23, 0
      %p85 = por %p83, %p84
      %s87 = sadd.s32 %s86, 1
      %p90 = scmp.eq.s32.totalorder %s17, 1
      %p91 = scmp.ne.s32.totalorder %s86, %s88
      %p92 = scmp.eq.s32.totalorder %s17, 0
      %p93 = por %p91, %p92
      %p94 = scmp.ne.s32.totalorder %s86, %s88
      %p95 = scmp.eq.s32.totalorder %s22, 1
      %p96 = por %p94, %p95
      %p97 = scmp.ne.s32.totalorder %s88, %s89
      %p98 = scmp.eq.s32.totalorder %s22, 0
      %p99 = por %p97, %p98
      %p100 = scmp.ne.s32.totalorder %s88, %s89
      %p101 = scmp.eq.s32.totalorder %s23, 1
      %p102 = por %p100, %p101
      %p104 = scmp.ne.s32.totalorder %s89, %s103
      %p105 = scmp.eq.s32.totalorder %s23, 0
      %p106 = por %p104, %p105
      %s108 = sadd.s32 %s107, 1
      %p111 = scmp.eq.s32.totalorder %s17, 1
      %p112 = scmp.ne.s32.totalorder %s107, %s109
      %p113 = scmp.eq.s32.totalorder %s17, 0
      %p114 = por %p112, %p113
      %p115 = scmp.ne.s32.totalorder %s107, %s109
      %p116 = scmp.eq.s32.totalorder %s22, 1
      %p117 = por %p115, %p116
      %p118 = scmp.ne.s32.totalorder %s109, %s110
      %p119 = scmp.eq.s32.totalorder %s22, 0
      %p120 = por %p118, %p119
      %p121 = scmp.ne.s32.totalorder %s109, %s110
      %p122 = scmp.eq.s32.totalorder %s23, 1
      %p123 = por %p121, %p122
      %p125 = scmp.ne.s32.totalorder %s110, %s124
      %p126 = scmp.eq.s32.totalorder %s23, 0
      %p127 = por %p125, %p126
      %s128 = ssub.s32 %s24, %s36
      %p129 = scmp.eq.s32.totalorder %s128, 0
      %s131 = sadd.s32 %s130, 1
      %s132 = scalar_select %p129, %s130, %s131
      %p135 = pneg %p129
      %p136 = scmp.eq.s32.totalorder %s17, 1
      %p137 = por %p135, %p136
      %p138 = scmp.ne.s32.totalorder %s130, %s133
      %p139 = scmp.eq.s32.totalorder %s17, 0
      %p140 = por %p138, %p139
      %p141 = scmp.ne.s32.totalorder %s130, %s133
      %p142 = scmp.eq.s32.totalorder %s22, 1
      %p143 = por %p141, %p142
      %p144 = scmp.ne.s32.totalorder %s133, %s134
      %p145 = scmp.eq.s32.totalorder %s22, 0
      %p146 = por %p144, %p145
      %p147 = scmp.ne.s32.totalorder %s133, %s134
      %p148 = scmp.eq.s32.totalorder %s23, 1
      %p149 = por %p147, %p148
      %p151 = scmp.ne.s32.totalorder %s134, %s150
      %p152 = scmp.eq.s32.totalorder %s23, 0
      %p153 = por %p151, %p152
      %p154 = scmp.le.s32.totalorder 1, %s17
      %p155 = scmp.lt.s32.totalorder %s17, 3
      %p156 = pnand %p154, %p155
      %p157 = pneg %p156
      // Predicated region
      $region9: #{tpu_custom_call.1} parent=5 // pred_check
        _
      $region10: #{tpu_custom_call.1} parent=5 // pred_check_branch
        %159 = sbr.rel (%p156) target = $region12
      $region11: #{tpu_custom_call.1} parent=5 // pred_region
        %s160 = ssub.s32 %s17, 1
        // Predicated region
        $region13: #{tpu_custom_call.1} parent=11 // pred_check
          %p161 = pneg %p78
        $region14: #{tpu_custom_call.1} parent=11 // pred_check_branch
          %163 = sbr.rel (%p161) target = $region16
        $region15: #{tpu_custom_call.1} parent=11 // pred_region
          %s165 = ssub.s32 1024, 1024
          %166 = vsyncadd [#allocation7], %s165
          %s167 = sshll.u32 [#allocation6], 4
          %s168 = int_to_ptr.vmem [resolvable:$true] %s167
          %173 = dma.hbm_to_vmem [thread:$0]  %s1, 1024, %s168, [#allocation7], 64, 64, 4
        $region16: #{tpu_custom_call.1} parent=11 // pred_fallthru
          _
        // Predicated region
        $region17: #{tpu_custom_call.1} parent=11 // pred_check
          %p174 = pneg %p99
        $region18: #{tpu_custom_call.1} parent=11 // pred_check_branch
          %176 = sbr.rel (%p174) target = $region20
        $region19: #{tpu_custom_call.1} parent=11 // pred_region
          %s178 = ssub.s32 1024, 1024
          %179 = vsyncadd [#allocation7], %s178
          %s180 = sshll.u32 [#allocation8], 4
          %s181 = int_to_ptr.vmem [resolvable:$true] %s180
          %186 = dma.hbm_to_vmem [thread:$0]  %s2, 1024, %s181, [#allocation7], 64, 64, 4
        $region20: #{tpu_custom_call.1} parent=11 // pred_fallthru
          _
        // Predicated region
        $region21: #{tpu_custom_call.1} parent=11 // pred_check
          %p187 = pneg %p120
        $region22: #{tpu_custom_call.1} parent=11 // pred_check_branch
          %189 = sbr.rel (%p187) target = $region24
        $region23: #{tpu_custom_call.1} parent=11 // pred_region
          _
        $region24: #{tpu_custom_call.1} parent=11 // pred_fallthru
          _
      $region12: #{tpu_custom_call.1} parent=5 // pred_fallthru
        _
      %p190 = scmp.lt.s32.totalorder %s17, 2
      // Predicated region
      $region25: #{tpu_custom_call.1} parent=5 // pred_check
        %p191 = pneg %p190
      $region26: #{tpu_custom_call.1} parent=5 // pred_check_branch
        %193 = sbr.rel (%p191) target = $region28
      $region27: #{tpu_custom_call.1} parent=5 // pred_region
        // Predicated region
        $region29: #{tpu_custom_call.1} parent=27 // pred_check
          %p194 = pneg %p51
        $region30: #{tpu_custom_call.1} parent=27 // pred_check_branch
          %196 = sbr.rel (%p194) target = $region32
        $region31: #{tpu_custom_call.1} parent=27 // pred_region
          %s197 = sand.u32 %s41, 1
          %s198 = scalar_lea.sflag [#allocation4], %s197
          %s199 = sand.u32 %s41, 1
          %s200 = smul.addr %s199, 32
          %s201 = scalar_lea.vmem [#allocation3], %s200
          %s202 = smul.u32 8, %s24
          %s204 = ssub.s32 512, 512
          %205 = vsyncadd %s198, %s204
          %s206 = sadd.s32 %s25, %s202
          %s207 = smul.addr %s206, 64
          %s208 = scalar_lea.hbm %s0, %s207
          %s209 = sshll.u32 %s201, 4
          %s210 = int_to_ptr.vmem [resolvable:$true] %s209
          %215 = dma.hbm_to_vmem [thread:$0]  %s208, 512, %s210, %s198, 64, 64, 4
        $region32: #{tpu_custom_call.1} parent=27 // pred_fallthru
          _
      $region28: #{tpu_custom_call.1} parent=5 // pred_fallthru
        _
      %p216 = scmp.le.s32.totalorder 1, %s17
      %p217 = scmp.lt.s32.totalorder %s17, 3
      %p218 = pnand %p216, %p217
      %p219 = pneg %p218
      // Predicated region
      $region33: #{tpu_custom_call.1} parent=5 // pred_check
        _
      $region34: #{tpu_custom_call.1} parent=5 // pred_check_branch
        %221 = sbr.rel (%p218) target = $region36
      $region35: #{tpu_custom_call.1} parent=5 // pred_region
        %s222 = ssub.s32 %s17, 1
        %s223 = sand.u32 %s44, 1
        %s224 = scalar_lea.sflag [#allocation4], %s223
        %s225 = sand.u32 %s44, 1
        %s226 = smul.addr %s225, 32
        %s227 = scalar_lea.vmem [#allocation3], %s226
        // Predicated region
        $region37: #{tpu_custom_call.1} parent=35 // pred_check
          %p228 = pneg %p57
        $region38: #{tpu_custom_call.1} parent=35 // pred_check_branch
          %230 = sbr.rel (%p228) target = $region40
        $region39: #{tpu_custom_call.1} parent=35 // pred_region
          %231 = dma.done %s224, 512
        $region40: #{tpu_custom_call.1} parent=35 // pred_fallthru
          _
        // Predicated region
        $region41: #{tpu_custom_call.1} parent=35 // pred_check
          %p232 = pneg %p78
        $region42: #{tpu_custom_call.1} parent=35 // pred_check_branch
          %234 = sbr.rel (%p232) target = $region44
        $region43: #{tpu_custom_call.1} parent=35 // pred_region
          %235 = dma.done [#allocation7], 1024
        $region44: #{tpu_custom_call.1} parent=35 // pred_fallthru
          _
        // Predicated region
        $region45: #{tpu_custom_call.1} parent=35 // pred_check
          %p236 = pneg %p99
        $region46: #{tpu_custom_call.1} parent=35 // pred_check_branch
          %238 = sbr.rel (%p236) target = $region48
        $region47: #{tpu_custom_call.1} parent=35 // pred_region
          %239 = dma.done [#allocation7], 1024
        $region48: #{tpu_custom_call.1} parent=35 // pred_fallthru
          _
        %s240 = sand.u32 %s44, 1
        %s241 = scalar_lea.sflag [#allocation4], %s240
        %s242 = sand.u32 %s44, 1
        %s243 = smul.addr %s242, 32
        %s244 = scalar_lea.vmem [#allocation3], %s243
        %p245 = pneg %p57
        %p246 = pneg %p54
        %p247 = pneg %p78
        %p248 = pneg %p75
        %p249 = pneg %p99
        %p250 = pneg %p96
        %p251 = pneg %p120
        %p252 = pneg %p117
        %p253 = pneg %p146
        %p254 = pneg %p143
        %s255 = sand.u32 %s133, 1
        %s256 = scalar_lea.sflag [#allocation5], %s255
        %s257 = sand.u32 %s133, 1
        %s258 = smul.addr %s257, 32
        %s259 = scalar_lea.vmem [#allocation9], %s258
        %s260 = smul.u32 8, %s26
        %s261 = smul.u32 8, %s26
        %s263 = smul.u32 %s27, 128
        %s264 = sshra.s32 %s263, 3
        %s265 = sand.u32 %s263, 7
        %s266 = smul.addr %s264, 4
        %s267 = scalar_lea.vmem [#allocation6], %s266
        %v268 = vld [vmem:[%s267] sm:$0xf]
        %v269 = vld [vmem:[%s267 + $0x4] sm:$0xf]
        %v270 = vld [vmem:[%s267 + $0x8] sm:$0xf]
        %v271 = vld [vmem:[%s267 + $0xc] sm:$0xf]
        %v272 = vld [vmem:[%s267 + $0x10] sm:$0xf]
        %v273 = vld [vmem:[%s267 + $0x14] sm:$0xf]
        %v274 = vld [vmem:[%s267 + $0x18] sm:$0xf]
        %v275 = vld [vmem:[%s267 + $0x1c] sm:$0xf]
        %v276 = vld [vmem:[%s267 + $0x20] sm:$0xf]
        %v277 = vld [vmem:[%s267 + $0x24] sm:$0xf]
        %v278 = vld [vmem:[%s267 + $0x28] sm:$0xf]
        %v279 = vld [vmem:[%s267 + $0x2c] sm:$0xf]
        %v280 = vld [vmem:[%s267 + $0x30] sm:$0xf]
        %v281 = vld [vmem:[%s267 + $0x34] sm:$0xf]
        %v282 = vld [vmem:[%s267 + $0x38] sm:$0xf]
        %v283 = vld [vmem:[%s267 + $0x3c] sm:$0xf]
        %v284 = vld [vmem:[%s227] sm:$0xf]
        %v285 = vld [vmem:[%s227 + $0x4] sm:$0xf]
        %v286 = vld [vmem:[%s227 + $0x8] sm:$0xf]
        %v287 = vld [vmem:[%s227 + $0xc] sm:$0xf]
        %v288 = vld [vmem:[%s227 + $0x10] sm:$0xf]
        %v289 = vld [vmem:[%s227 + $0x14] sm:$0xf]
        %v290 = vld [vmem:[%s227 + $0x18] sm:$0xf]
        %v291 = vld [vmem:[%s227 + $0x1c] sm:$0xf]
        %v300 = vunpack.c.l.b16 %v284
        %v301 = vunpack.c.l.b16 %v285
        %v302 = vunpack.c.l.b16 %v286
        %v303 = vunpack.c.l.b16 %v287
        %v304 = vunpack.c.l.b16 %v288
        %v305 = vunpack.c.l.b16 %v289
        %v306 = vunpack.c.l.b16 %v290
        %v307 = vunpack.c.l.b16 %v291
        %v308 = vpack.c.b16 %v301, %v300
        %v309 = vpack.c.b16 %v303, %v302
        %v310 = vpack.c.b16 %v305, %v304
        %v311 = vpack.c.b16 %v307, %v306
        %v332 = vunpack.c.l.b16 %v268
        %v333 = vunpack.c.l.b16 %v269
        %v334 = vunpack.c.l.b16 %v270
        %v335 = vunpack.c.l.b16 %v271
        %v336 = vunpack.c.l.b16 %v272
        %v337 = vunpack.c.l.b16 %v273
        %v338 = vunpack.c.l.b16 %v274
        %v339 = vunpack.c.l.b16 %v275
        %v340 = vunpack.c.l.b16 %v276
        %v341 = vunpack.c.l.b16 %v277
        %v342 = vunpack.c.l.b16 %v278
        %v343 = vunpack.c.l.b16 %v279
        %v344 = vunpack.c.l.b16 %v280
        %v345 = vunpack.c.l.b16 %v281
        %v346 = vunpack.c.l.b16 %v282
        %v347 = vunpack.c.l.b16 %v283
        %v348 = vpack.c.b16 %v333, %v332
        %v349 = vpack.c.b16 %v335, %v334
        %v350 = vpack.c.b16 %v337, %v336
        %v351 = vpack.c.b16 %v339, %v338
        %v352 = vpack.c.b16 %v341, %v340
        %v353 = vpack.c.b16 %v343, %v342
        %v354 = vpack.c.b16 %v345, %v344
        %v355 = vpack.c.b16 %v347, %v346
        %364 = vmatprep.subr.bf16.mxu0 0
        %365 = vmatpush1.bf16.msra.mxu0 %v355
        %366 = vmatprep.subr.bf16.mxu0 0
        %367 = vmatpush1.bf16.msra.mxu0 %v354
        %368 = vmatprep.subr.bf16.mxu0 0
        %369 = vmatpush1.bf16.msra.mxu0 %v353
        %370 = vmatprep.subr.bf16.mxu0 0
        %371 = vmatpush1.bf16.msra.mxu0 %v352
        %372 = vmatprep.subr.bf16.mxu0 0
        %373 = vmatpush1.bf16.msra.mxu0 %v351
        %374 = vmatprep.subr.bf16.mxu0 0
        %375 = vmatpush1.bf16.msra.mxu0 %v350
        %376 = vmatprep.subr.bf16.mxu0 0
        %377 = vmatpush1.bf16.msra.mxu0 %v349
        %378 = vmatprep.subr.bf16.mxu0 0
        %379 = vmatpush1.bf16.msra.mxu0 %v348
        %380 = vmatprep.subr.bf16.mxu0 0
        %381 = vmatpush2.bf16.msra.mxu0 0
        %382 = vmatprep.subr.bf16.mxu0 0
        %383 = vmatpush2.bf16.msra.mxu0 0
        %384 = vmatprep.subr.bf16.mxu0 0
        %385 = vmatpush2.bf16.msra.mxu0 0
        %386 = vmatprep.subr.bf16.mxu0 0
        %387 = vmatpush2.bf16.msra.mxu0 0
        %388 = vmatprep.subr.bf16.mxu0 0
        %389 = vmatpush2.bf16.msra.mxu0 0
        %390 = vmatprep.subr.bf16.mxu0 0
        %391 = vmatpush2.bf16.msra.mxu0 0
        %392 = vmatprep.subr.bf16.mxu0 0
        %393 = vmatpush2.bf16.msra.mxu0 0
        %394 = vmatprep.subr.bf16.mxu0 0
        %395 = vmatpush2.bf16.msra.mxu0 0
        %396 = vmatprep.mubr.bf16.mxu0 0
        %397 = vmatmul.mubr.bf16.gmra.mxu0 %v308
        %v398 = vpop.f32.mrf.mxu0
        %v399 = vadd.f32 0.0, %v398
        %v400 = vpop.f32.mrf.mxu0
        %v401 = vpop.f32.mrf.mxu0
        %v402 = vadd.f32 0.0, %v401
        %v403 = vpop.f32.mrf.mxu0
        %404 = vmatprep.mubr.bf16.mxu0 0
        %405 = vmatmul.mubr.bf16.gmra.mxu0 %v309
        %v406 = vpop.f32.mrf.mxu0
        %v407 = vadd.f32 0.0, %v406
        %v408 = vpop.f32.mrf.mxu0
        %v409 = vpop.f32.mrf.mxu0
        %v410 = vadd.f32 0.0, %v409
        %v411 = vpop.f32.mrf.mxu0
        %412 = vmatprep.mubr.bf16.mxu0 0
        %413 = vmatmul.mubr.bf16.gmra.mxu0 %v310
        %v414 = vpop.f32.mrf.mxu0
        %v415 = vadd.f32 0.0, %v414
        %v416 = vpop.f32.mrf.mxu0
        %v417 = vpop.f32.mrf.mxu0
        %v418 = vadd.f32 0.0, %v417
        %v419 = vpop.f32.mrf.mxu0
        %420 = vmatprep.mubr.bf16.mxu0 0
        %421 = vmatmul.mubr.bf16.gmra.mxu0 %v311
        %v422 = vpop.f32.mrf.mxu0
        %v423 = vadd.f32 0.0, %v422
        %v424 = vpop.f32.mrf.mxu0
        %v425 = vpop.f32.mrf.mxu0
        %v426 = vadd.f32 0.0, %v425
        %v427 = vpop.f32.mrf.mxu0
        %428 = vdwg.mxu0
        %p429 = scmp.eq.s32.totalorder %s27, 0
        // Predicated region
        $region49: #{tpu_custom_call.1} parent=35 // pred_check
          %p430 = pneg %p429
        $region50: #{tpu_custom_call.1} parent=35 // pred_check_branch
          %432 = sbr.rel (%p430) target = $region52
        $region51: #{tpu_custom_call.1} parent=35 // pred_region
          %433 = vst [vmem:[#allocation2] sm:$0xff] %v399
          %434 = vst [vmem:[#allocation2 + $0x8] sm:$0xff] %v402
          %435 = vst [vmem:[#allocation2 + $0x10] sm:$0xff] %v407
          %436 = vst [vmem:[#allocation2 + $0x18] sm:$0xff] %v410
          %437 = vst [vmem:[#allocation2 + $0x20] sm:$0xff] %v415
          %438 = vst [vmem:[#allocation2 + $0x28] sm:$0xff] %v418
          %439 = vst [vmem:[#allocation2 + $0x30] sm:$0xff] %v423
          %440 = vst [vmem:[#allocation2 + $0x38] sm:$0xff] %v426
        $region52: #{tpu_custom_call.1} parent=35 // pred_fallthru
          _
        %p441 = scmp.gt.s32.totalorder %s27, 0
        // Predicated region
        $region53: #{tpu_custom_call.1} parent=35 // pred_check
          %p442 = pneg %p441
        $region54: #{tpu_custom_call.1} parent=35 // pred_check_branch
          %444 = sbr.rel (%p442) target = $region56
        $region55: #{tpu_custom_call.1} parent=35 // pred_region
          %v445 = vld [vmem:[#allocation2] sm:$0xff]
          %v446 = vld [vmem:[#allocation2 + $0x8] sm:$0xff]
          %v447 = vld [vmem:[#allocation2 + $0x10] sm:$0xff]
          %v448 = vld [vmem:[#allocation2 + $0x18] sm:$0xff]
          %v449 = vld [vmem:[#allocation2 + $0x20] sm:$0xff]
          %v450 = vld [vmem:[#allocation2 + $0x28] sm:$0xff]
          %v451 = vld [vmem:[#allocation2 + $0x30] sm:$0xff]
          %v452 = vld [vmem:[#allocation2 + $0x38] sm:$0xff]
          %v453 = vadd.f32 %v445, %v399
          %v454 = vadd.f32 %v446, %v402
          %v455 = vadd.f32 %v447, %v407
          %v456 = vadd.f32 %v448, %v410
          %v457 = vadd.f32 %v449, %v415
          %v458 = vadd.f32 %v450, %v418
          %v459 = vadd.f32 %v451, %v423
          %v460 = vadd.f32 %v452, %v426
          %461 = vst [vmem:[#allocation2] sm:$0xff] %v453
          %462 = vst [vmem:[#allocation2 + $0x8] sm:$0xff] %v454
          %463 = vst [vmem:[#allocation2 + $0x10] sm:$0xff] %v455
          %464 = vst [vmem:[#allocation2 + $0x18] sm:$0xff] %v456
          %465 = vst [vmem:[#allocation2 + $0x20] sm:$0xff] %v457
          %466 = vst [vmem:[#allocation2 + $0x28] sm:$0xff] %v458
          %467 = vst [vmem:[#allocation2 + $0x30] sm:$0xff] %v459
          %468 = vst [vmem:[#allocation2 + $0x38] sm:$0xff] %v460
        $region56: #{tpu_custom_call.1} parent=35 // pred_fallthru
          _
        // Predicated region
        $region57: #{tpu_custom_call.1} parent=35 // pred_check
          %p469 = pneg %p429
        $region58: #{tpu_custom_call.1} parent=35 // pred_check_branch
          %471 = sbr.rel (%p469) target = $region60
        $region59: #{tpu_custom_call.1} parent=35 // pred_region
          %v472 = vld [vmem:[#allocation2] sm:$0xff]
          %v473 = vld [vmem:[#allocation2 + $0x8] sm:$0xff]
          %v474 = vld [vmem:[#allocation2 + $0x10] sm:$0xff]
          %v475 = vld [vmem:[#allocation2 + $0x18] sm:$0xff]
          %v476 = vld [vmem:[#allocation2 + $0x20] sm:$0xff]
          %v477 = vld [vmem:[#allocation2 + $0x28] sm:$0xff]
          %v478 = vld [vmem:[#allocation2 + $0x30] sm:$0xff]
          %v479 = vld [vmem:[#allocation2 + $0x38] sm:$0xff]
          %v480 = vpack.c.bf16 %v473, %v472
          %v481 = vpack.c.bf16 %v475, %v474
          %v482 = vpack.c.bf16 %v477, %v476
          %v483 = vpack.c.bf16 %v479, %v478
          %v484 = vld [vmem:[#allocation8] sm:$0xf]
          %v485 = vld [vmem:[#allocation8 + $0x4] sm:$0xf]
          %v486 = vld [vmem:[#allocation8 + $0x8] sm:$0xf]
          %v487 = vld [vmem:[#allocation8 + $0xc] sm:$0xf]
          %v488 = vld [vmem:[#allocation8 + $0x10] sm:$0xf]
          %v489 = vld [vmem:[#allocation8 + $0x14] sm:$0xf]
          %v490 = vld [vmem:[#allocation8 + $0x18] sm:$0xf]
          %v491 = vld [vmem:[#allocation8 + $0x1c] sm:$0xf]
          %v492 = vld [vmem:[#allocation8 + $0x20] sm:$0xf]
          %v493 = vld [vmem:[#allocation8 + $0x24] sm:$0xf]
          %v494 = vld [vmem:[#allocation8 + $0x28] sm:$0xf]
          %v495 = vld [vmem:[#allocation8 + $0x2c] sm:$0xf]
          %v496 = vld [vmem:[#allocation8 + $0x30] sm:$0xf]
          %v497 = vld [vmem:[#allocation8 + $0x34] sm:$0xf]
          %v498 = vld [vmem:[#allocation8 + $0x38] sm:$0xf]
          %v499 = vld [vmem:[#allocation8 + $0x3c] sm:$0xf]
          %v500 = vld [vmem:[%s3] sm:$0x1]
          %v502 = vlaneseq
          %v503 = vshrl.u32 %v502, 7
          %v504 = vsub.s32 0, %v503
          %v505 = vrot.slane %v500, %v504
          %v523 = vunpack.c.l.b16 %v484
          %v524 = vunpack.c.l.b16 %v485
          %v525 = vunpack.c.l.b16 %v486
          %v526 = vunpack.c.l.b16 %v487
          %v527 = vunpack.c.l.b16 %v488
          %v528 = vunpack.c.l.b16 %v489
          %v529 = vunpack.c.l.b16 %v490
          %v530 = vunpack.c.l.b16 %v491
          %v531 = vunpack.c.l.b16 %v492
          %v532 = vunpack.c.l.b16 %v493
          %v533 = vunpack.c.l.b16 %v494
          %v534 = vunpack.c.l.b16 %v495
          %v535 = vunpack.c.l.b16 %v496
          %v536 = vunpack.c.l.b16 %v497
          %v537 = vunpack.c.l.b16 %v498
          %v538 = vunpack.c.l.b16 %v499
          %v539 = vpack.c.b16 %v524, %v523
          %v540 = vpack.c.b16 %v526, %v525
          %v541 = vpack.c.b16 %v528, %v527
          %v542 = vpack.c.b16 %v530, %v529
          %v543 = vpack.c.b16 %v532, %v531
          %v544 = vpack.c.b16 %v534, %v533
          %v545 = vpack.c.b16 %v536, %v535
          %v546 = vpack.c.b16 %v538, %v537
          %555 = vmatprep.subr.bf16.mxu0 0
          %556 = vmatpush1.bf16.msra.mxu0 %v546
          %557 = vmatprep.subr.bf16.mxu0 0
          %558 = vmatpush1.bf16.msra.mxu0 %v545
          %559 = vmatprep.subr.bf16.mxu0 0
          %560 = vmatpush1.bf16.msra.mxu0 %v544
          %561 = vmatprep.subr.bf16.mxu0 0
          %562 = vmatpush1.bf16.msra.mxu0 %v543
          %563 = vmatprep.subr.bf16.mxu0 0
          %564 = vmatpush1.bf16.msra.mxu0 %v542
          %565 = vmatprep.subr.bf16.mxu0 0
          %566 = vmatpush1.bf16.msra.mxu0 %v541
          %567 = vmatprep.subr.bf16.mxu0 0
          %568 = vmatpush1.bf16.msra.mxu0 %v540
          %569 = vmatprep.subr.bf16.mxu0 0
          %570 = vmatpush1.bf16.msra.mxu0 %v539
          %571 = vmatprep.subr.bf16.mxu0 0
          %572 = vmatpush2.bf16.msra.mxu0 0
          %573 = vmatprep.subr.bf16.mxu0 0
          %574 = vmatpush2.bf16.msra.mxu0 0
          %575 = vmatprep.subr.bf16.mxu0 0
          %576 = vmatpush2.bf16.msra.mxu0 0
          %577 = vmatprep.subr.bf16.mxu0 0
          %578 = vmatpush2.bf16.msra.mxu0 0
          %579 = vmatprep.subr.bf16.mxu0 0
          %580 = vmatpush2.bf16.msra.mxu0 0
          %581 = vmatprep.subr.bf16.mxu0 0
          %582 = vmatpush2.bf16.msra.mxu0 0
          %583 = vmatprep.subr.bf16.mxu0 0
          %584 = vmatpush2.bf16.msra.mxu0 0
          %585 = vmatprep.subr.bf16.mxu0 0
          %586 = vmatpush2.bf16.msra.mxu0 0
          %587 = vmatprep.mubr.bf16.mxu0 0
          %588 = vmatmul.mubr.bf16.gmra.mxu0 %v480
          %v589 = vpop.f32.mrf.mxu0
          %v590 = vadd.f32 %v505, %v589
          %v591 = vpop.f32.mrf.mxu0
          %v592 = vpop.f32.mrf.mxu0
          %v593 = vadd.f32 %v505, %v592
          %v594 = vpop.f32.mrf.mxu0
          %595 = vmatprep.mubr.bf16.mxu0 0
          %596 = vmatmul.mubr.bf16.gmra.mxu0 %v481
          %v597 = vpop.f32.mrf.mxu0
          %v598 = vadd.f32 %v505, %v597
          %v599 = vpop.f32.mrf.mxu0
          %v600 = vpop.f32.mrf.mxu0
          %v601 = vadd.f32 %v505, %v600
          %v602 = vpop.f32.mrf.mxu0
          %603 = vmatprep.mubr.bf16.mxu0 0
          %604 = vmatmul.mubr.bf16.gmra.mxu0 %v482
          %v605 = vpop.f32.mrf.mxu0
          %v606 = vadd.f32 %v505, %v605
          %v607 = vpop.f32.mrf.mxu0
          %v608 = vpop.f32.mrf.mxu0
          %v609 = vadd.f32 %v505, %v608
          %v610 = vpop.f32.mrf.mxu0
          %611 = vmatprep.mubr.bf16.mxu0 0
          %612 = vmatmul.mubr.bf16.gmra.mxu0 %v483
          %v613 = vpop.f32.mrf.mxu0
          %v614 = vadd.f32 %v505, %v613
          %v615 = vpop.f32.mrf.mxu0
          %v616 = vpop.f32.mrf.mxu0
          %v617 = vadd.f32 %v505, %v616
          %v618 = vpop.f32.mrf.mxu0
          %619 = vdwg.mxu0
          %v620 = vmax.f32 %v590, 0.0
          %v621 = vmax.f32 %v593, 0.0
          %v622 = vmax.f32 %v598, 0.0
          %v623 = vmax.f32 %v601, 0.0
          %v624 = vmax.f32 %v606, 0.0
          %v625 = vmax.f32 %v609, 0.0
          %v626 = vmax.f32 %v614, 0.0
          %v627 = vmax.f32 %v617, 0.0
          %v628 = vpack.c.bf16 %v621, %v620
          %v629 = vpack.c.bf16 %v623, %v622
          %v630 = vpack.c.bf16 %v625, %v624
          %v631 = vpack.c.bf16 %v627, %v626
          %v636 = vunpack.c.l.b16 %v628
          %v637 = vunpack.c.h.b16 %v628
          %v638 = vunpack.c.l.b16 %v629
          %v639 = vunpack.c.h.b16 %v629
          %v640 = vunpack.c.l.b16 %v630
          %v641 = vunpack.c.h.b16 %v630
          %v642 = vunpack.c.l.b16 %v631
          %v643 = vunpack.c.h.b16 %v631
          %v644 = vpack.c.b16 %v636, %v636
          %v645 = vpack.c.b16 %v637, %v637
          %v646 = vpack.c.b16 %v638, %v638
          %v647 = vpack.c.b16 %v639, %v639
          %v648 = vpack.c.b16 %v640, %v640
          %v649 = vpack.c.b16 %v641, %v641
          %v650 = vpack.c.b16 %v642, %v642
          %v651 = vpack.c.b16 %v643, %v643
          %660 = vst [vmem:[%s259] sm:$0xf] %v644
          %661 = vst [vmem:[%s259 + $0x4] sm:$0xf] %v645
          %662 = vst [vmem:[%s259 + $0x8] sm:$0xf] %v646
          %663 = vst [vmem:[%s259 + $0xc] sm:$0xf] %v647
          %664 = vst [vmem:[%s259 + $0x10] sm:$0xf] %v648
          %665 = vst [vmem:[%s259 + $0x14] sm:$0xf] %v649
          %666 = vst [vmem:[%s259 + $0x18] sm:$0xf] %v650
          %667 = vst [vmem:[%s259 + $0x1c] sm:$0xf] %v651
        $region60: #{tpu_custom_call.1} parent=35 // pred_fallthru
          _
        %s668 = sand.u32 %s133, 1
        %s669 = scalar_lea.sflag [#allocation5], %s668
        %s670 = sand.u32 %s133, 1
        %s671 = smul.addr %s670, 32
        %s672 = scalar_lea.vmem [#allocation9], %s671
        // Predicated region
        $region61: #{tpu_custom_call.1} parent=35 // pred_check
          %p673 = pneg %p143
        $region62: #{tpu_custom_call.1} parent=35 // pred_check_branch
          %675 = sbr.rel (%p673) target = $region64
        $region63: #{tpu_custom_call.1} parent=35 // pred_region
          %s676 = smul.u32 8, %s26
          %s678 = ssub.s32 512, 512
          %679 = vsyncadd %s669, %s678
          %s680 = smul.addr %s676, 64
          %s681 = scalar_lea.hbm %s4, %s680
          %s682 = sshll.u32 %s672, 4
          %s683 = int_to_ptr.vmem [resolvable:$true] %s682
          %688 = dma.vmem_to_hbm [thread:$0]  %s683, 512, %s681, %s669, 64, 64, 4
        $region64: #{tpu_custom_call.1} parent=35 // pred_fallthru
          _
      $region36: #{tpu_custom_call.1} parent=5 // pred_fallthru
        _
      %p689 = scmp.le.s32.totalorder 2, %s17
      // Predicated region
      $region65: #{tpu_custom_call.1} parent=5 // pred_check
        %p690 = pneg %p689
      $region66: #{tpu_custom_call.1} parent=5 // pred_check_branch
        %692 = sbr.rel (%p690) target = $region68
      $region67: #{tpu_custom_call.1} parent=5 // pred_region
        %s693 = ssub.s32 %s17, 2
        // Predicated region
        $region69: #{tpu_custom_call.1} parent=67 // pred_check
          %p694 = pneg %p149
        $region70: #{tpu_custom_call.1} parent=67 // pred_check_branch
          %696 = sbr.rel (%p694) target = $region72
        $region71: #{tpu_custom_call.1} parent=67 // pred_region
          %s697 = sand.u32 %s134, 1
          %s698 = scalar_lea.sflag [#allocation5], %s697
          %s699 = sand.u32 %s134, 1
          %s700 = smul.addr %s699, 32
          %s701 = scalar_lea.vmem [#allocation9], %s700
          %702 = dma.done %s698, 512
        $region72: #{tpu_custom_call.1} parent=67 // pred_fallthru
          _
      $region68: #{tpu_custom_call.1} parent=5 // pred_fallthru
        _
    $region6: #{tpu_custom_call.1} parent=1 // loop_footer
      %s21 = sadd.s32 1, %s17
    $region7: #{tpu_custom_call.1} parent=1 // loop_footer_branch
      %16 = sbr.rel target = $region3
    $region8: #{tpu_custom_call.1} parent=1 // loop_exit
      _
    %703 = vsyncpa [#allocation4], 1
    %s704 = scalar_lea.sflag [#allocation4], 1
    %705 = vsyncpa %s704, 1
    %706 = vsyncpa [#allocation7], 1
    %707 = vsyncpa [#allocation5], 1
    %s708 = scalar_lea.sflag [#allocation5], 1
    %709 = vsyncpa %s708, 1

</llo_original>
